<compile_context>
chip_gen: v7x
topology: tpu7x:2x2x1
jax: 0.10.0
libtpu: 0.0.40
codegen_flags: <defaults>
</compile_context>

<pallas_src>
import numpy as np
import jax
import jax.numpy as jnp
from jax.experimental import pallas as pl
from jax.experimental.pallas import tpu as pltpu


def _gaussian_kernel1d(window_size: int, sigma: float) -> np.ndarray:
    # kornia get_gaussian_kernel1d semantics (f32)
    x = np.arange(window_size, dtype=np.float32) - window_size // 2
    if window_size % 2 == 0:
        x = x + 0.5
    g = np.exp(-(x ** 2) / (2.0 * np.float32(sigma) ** 2)).astype(np.float32)
    return (g / g.sum()).astype(np.float32)


def _make_canny_kernel(C, H, W, ky, kx, gk_y, gk_x, low_threshold, eps):
    ry, rx = ky // 2, kx // 2
    gk_y = [float(v) for v in gk_y]
    gk_x = [float(v) for v in gk_x]
    TAN22 = 0.41421356237309503   # tan(22.5 deg)
    TAN67 = 2.414213562373095     # tan(67.5 deg)

    def kernel(x_ref, mag_ref, edge_ref):
        # ---------------- fused RGB -> grayscale (kornia rgb_to_grayscale) -------
        if C == 3:
            g = 0.299 * x_ref[0, 0] + 0.587 * x_ref[0, 1] + 0.114 * x_ref[0, 2]
        else:
            g = x_ref[0, 0]

        col = jax.lax.broadcasted_iota(jnp.int32, (H, W), 1)
        row = jax.lax.broadcasted_iota(jnp.int32, (H, W), 0)

        # shift helpers: result[i, j] = x[i, j + d] (cols) / x[i + d, j] (rows) for
        # in-range source indices; out-of-range positions wrap circularly and are
        # overwritten by the boundary fixups below.  Rolls hit the idle XLU slot.
        def shift_c(x, d):
            return pltpu.roll(x, (-d) % W, 1)

        def shift_r(x, d):
            return pltpu.roll(x, (-d) % H, 0)

        def tap_c_reflect(x, d):
            if d == 0:
                return x
            y = shift_c(x, d)
            if d < 0:
                for j in range(-d):                       # j + d < 0  ->  x[:, -(j+d)]
                    src = -(j + d)
                    y = jnp.where(col == j, x[:, src:src + 1], y)
            else:
                for j in range(W - d, W):                 # j + d >= W ->  x[:, 2W-2-(j+d)]
                    src = 2 * (W - 1) - j - d
                    y = jnp.where(col == j, x[:, src:src + 1], y)
            return y

        def tap_r_reflect(x, d):
            if d == 0:
                return x
            y = shift_r(x, d)
            if d < 0:
                for i in range(-d):
                    src = -(i + d)
                    y = jnp.where(row == i, x[src:src + 1, :], y)
            else:
                for i in range(H - d, H):
                    src = 2 * (H - 1) - i - d
                    y = jnp.where(row == i, x[src:src + 1, :], y)
            return y

        def tap_c_replicate(x, d):
            y = shift_c(x, d)
            if d < 0:
                return jnp.where(col < -d, x[:, 0:1], y)
            return jnp.where(col >= W - d, x[:, W - 1:W], y)

        def tap_r_replicate(x, d):
            y = shift_r(x, d)
            if d < 0:
                return jnp.where(row < -d, x[0:1, :], y)
            return jnp.where(row >= H - d, x[H - 1:H, :], y)

        def tap_c_zero(x, d):
            y = shift_c(x, d)
            if d < 0:
                return jnp.where(col < -d, 0.0, y)
            return jnp.where(col >= W - d, 0.0, y)

        def tap_r_zero(x, d):
            y = shift_r(x, d)
            if d < 0:
                return jnp.where(row < -d, 0.0, y)
            return jnp.where(row >= H - d, 0.0, y)

        # ---------------- 1) separable gaussian blur, reflect padding ------------
        hb = None
        for b in range(kx):
            d = b - rx
            t = g if d == 0 else tap_c_reflect(g, d)
            term = gk_x[b] * t
            hb = term if hb is None else hb + term
        blur = None
        for a in range(ky):
            d = a - ry
            t = hb if d == 0 else tap_r_reflect(hb, d)
            term = gk_y[a] * t
            blur = term if blur is None else blur + term

        # ---------------- 2) separable sobel gradients, replicate padding --------
        bl = tap_c_replicate(blur, -1)
        br = tap_c_replicate(blur, +1)
        dxc = br - bl                       # [-1, 0, 1] along columns
        sxc = bl + 2.0 * blur + br          # [ 1, 2, 1] along columns
        gx = tap_r_replicate(dxc, -1) + 2.0 * dxc + tap_r_replicate(dxc, +1)
        gy = tap_r_replicate(sxc, +1) - tap_r_replicate(sxc, -1)

        # ---------------- 3) magnitude -------------------------------------------
        mag = jnp.sqrt(gx * gx + gy * gy + eps)

        # ---------------- 4) directional non-max suppression (zero padding) ------
        n_r = tap_c_zero(mag, +1)
        n_l = tap_c_zero(mag, -1)
        n_d = tap_r_zero(mag, +1)
        n_u = tap_r_zero(mag, -1)
        n_dr = tap_r_zero(n_r, +1)
        n_ur = tap_r_zero(n_r, -1)
        n_dl = tap_r_zero(n_l, +1)
        n_ul = tap_r_zero(n_l, -1)

        # Sector of round(atan2(gy, gx) / 45deg) mod 8, but is_max only needs the
        # suppression *axis* (offset(k+4) == -offset(k)), so a 4-way select suffices.
        agx = jnp.abs(gx)
        agy = jnp.abs(gy)
        is_horiz = agy <= TAN22 * agx          # directions 0 / 4
        is_vert = agy >= TAN67 * agx           # directions 2 / 6
        same_sign = (gx * gy) >= 0.0           # diagonal (1,1)/(-1,-1) vs (1,-1)/(-1,1)

        nb_p = jnp.where(is_horiz, n_r,
                         jnp.where(is_vert, n_d,
                                   jnp.where(same_sign, n_dr, n_dl)))
        nb_n = jnp.where(is_horiz, n_l,
                         jnp.where(is_vert, n_u,
                                   jnp.where(same_sign, n_ul, n_ur)))
        is_max = jnp.logical_and(mag > nb_p, mag > nb_n)
        mag_out = jnp.where(is_max, mag, 0.0)

        # ---------------- 5) threshold (F.threshold(x, low, 0)) ------------------
        edges = jnp.where(mag_out > low_threshold, mag_out, 0.0)

        mag_ref[0] = mag_out
        edge_ref[0] = edges

    return kernel


def canny_pallas(images, low_threshold, high_threshold, kernel_size=(5, 5),
                 sigma=(1.0, 1.0), hysteresis=True, eps=1e-6):
    assert low_threshold is not None and high_threshold is not None
    assert low_threshold <= high_threshold
    assert 0.0 < low_threshold < 1.0 and 0.0 < high_threshold < 1.0
    if isinstance(kernel_size, int):
        kernel_size = (kernel_size, kernel_size)
    ky, kx = int(kernel_size[0]), int(kernel_size[1])
    sy, sx = float(sigma[0]), float(sigma[1])

    B, C, H, W = images.shape
    if C not in (1, 3):
        raise ValueError("canny expects 1 or 3 channels")
    assert H > ky // 2 and W > kx // 2, "image too small for reflect padding"
    images = images.astype(jnp.float32)

    gk_y = _gaussian_kernel1d(ky, sy)
    gk_x = _gaussian_kernel1d(kx, sx)

    # NOTE: the truncated reference never uses high_threshold / hysteresis after
    # thresholding, so neither do we.
    # TODO(synk): torch.cuda.amp.autocast mixed precision is not reproduced; all math is f32.
    kernel = _make_canny_kernel(C, H, W, ky, kx, gk_y, gk_x,
                                float(low_threshold), float(eps))

    # Whole-image blocks: raise the scoped-VMEM limit when the pipelined blocks plus
    # compiler temporaries would exceed the default.
    # TODO(synk): for very large images (>~1k x 1k) switch to row tiling with a
    # (ry+2)-row halo so blocks fit v7x's 64 MiB VMEM and both TensorCores engage.
    cp_kwargs = dict(dimension_semantics=("parallel",))
    est_vmem = (2 * C + 20) * H * W * 4
    if est_vmem > 28 * 1024 * 1024:
        cp_kwargs["vmem_limit_bytes"] = int(min(est_vmem, 100 * 1024 * 1024))

    mag, edges = pl.pallas_call(
        kernel,
        out_shape=(jax.ShapeDtypeStruct((B, H, W), jnp.float32),
                   jax.ShapeDtypeStruct((B, H, W), jnp.float32)),
        grid_spec=pltpu.PrefetchScalarGridSpec(
            num_scalar_prefetch=0,
            grid=(B,),
            in_specs=[pl.BlockSpec((1, C, H, W), lambda b: (b, 0, 0, 0))],
            out_specs=(pl.BlockSpec((1, H, W), lambda b: (b, 0, 0)),
                       pl.BlockSpec((1, H, W), lambda b: (b, 0, 0)))),
        compiler_params=pltpu.CompilerParams(**cp_kwargs),
    )(images)

    # reference returns (B, 1, H, W) for both outputs
    return mag[:, None, :, :], edges[:, None, :, :]


if __name__ == "__main__":
    key = jax.random.PRNGKey(0)
    # Small but hardware-friendly spatial size: H=16 (two sublane tiles), W=128 (one
    # full lane tile) so vector ops and the two output stores are lane-dense.
    x = jax.random.uniform(key, (2, 3, 16, 128), dtype=jnp.float32)  # NCHW RGB in [0,1)
    magnitude, edges = canny_pallas(x, low_threshold=0.1, high_threshold=0.2)
    jax.block_until_ready((magnitude, edges))
    assert magnitude.shape == (2, 1, 16, 128) and edges.shape == (2, 1, 16, 128)
    assert magnitude.dtype == jnp.float32 and edges.dtype == jnp.float32
    print("KERNEL_OK")
</pallas_src>

<mosaic_0001>
module attributes {stable_mosaic.version = 11 : i64} {
  func.func @kernel(%arg0: i32, %arg1: memref<1x3x16x128xf32, #tpu.memory_space<vmem>>, %arg2: memref<1x16x128xf32, #tpu.memory_space<vmem>>, %arg3: memref<1x16x128xf32, #tpu.memory_space<vmem>>) attributes {dimension_semantics = [#tpu.dimension_semantics<parallel>], iteration_bounds = array<i64: 2>, scalar_prefetch = 0 : i64, scratch_operands = 0 : i64, tpu.core_type = #tpu.core_type<tc>, window_params = [{transform_indices = @transform_0, window_bounds = array<i64: 1, 3, 16, 128>}, {transform_indices = @transform_1, window_bounds = array<i64: 1, 16, 128>}, {transform_indices = @transform_2, window_bounds = array<i64: 1, 16, 128>}]} {
    %c0 = arith.constant 0 : index
    %c0_0 = arith.constant 0 : index
    %c0_1 = arith.constant 0 : index
    %c0_2 = arith.constant 0 : index
    %0 = vector.load %arg1[%c0, %c0_0, %c0_1, %c0_2] : memref<1x3x16x128xf32, #tpu.memory_space<vmem>>, vector<1x1x16x128xf32>
    %1 = vector.shape_cast %0 : vector<1x1x16x128xf32> to vector<16x128xf32>
    %cst = arith.constant 2.990000e-01 : f32
    %2 = vector.broadcast %cst : f32 to vector<16x128xf32>
    %3 = arith.mulf %2, %1 : vector<16x128xf32>
    %c0_3 = arith.constant 0 : index
    %c1 = arith.constant 1 : index
    %c0_4 = arith.constant 0 : index
    %c0_5 = arith.constant 0 : index
    %4 = vector.load %arg1[%c0_3, %c1, %c0_4, %c0_5] : memref<1x3x16x128xf32, #tpu.memory_space<vmem>>, vector<1x1x16x128xf32>
    %5 = vector.shape_cast %4 : vector<1x1x16x128xf32> to vector<16x128xf32>
    %cst_6 = arith.constant 5.870000e-01 : f32
    %6 = vector.broadcast %cst_6 : f32 to vector<16x128xf32>
    %7 = arith.mulf %6, %5 : vector<16x128xf32>
    %8 = arith.addf %3, %7 : vector<16x128xf32>
    %c0_7 = arith.constant 0 : index
    %c2 = arith.constant 2 : index
    %c0_8 = arith.constant 0 : index
    %c0_9 = arith.constant 0 : index
    %9 = vector.load %arg1[%c0_7, %c2, %c0_8, %c0_9] : memref<1x3x16x128xf32, #tpu.memory_space<vmem>>, vector<1x1x16x128xf32>
    %10 = vector.shape_cast %9 : vector<1x1x16x128xf32> to vector<16x128xf32>
    %cst_10 = arith.constant 1.140000e-01 : f32
    %11 = vector.broadcast %cst_10 : f32 to vector<16x128xf32>
    %12 = arith.mulf %11, %10 : vector<16x128xf32>
    %13 = arith.addf %8, %12 : vector<16x128xf32>
    %14 = tpu.iota {dimensions = array<i32: 1>} : vector<16x128xi32>
    %15 = tpu.iota {dimensions = array<i32: 0>} : vector<16x128xi32>
    %c2_i32 = arith.constant 2 : i32
    %16 = tpu.dynamic_rotate %13 by %c2_i32 dim 1 : vector<16x128xf32>, i32 -> vector<16x128xf32>
    %c0_i32 = arith.constant 0 : i32
    %17 = vector.broadcast %c0_i32 : i32 to vector<16x128xi32>
    %18 = arith.cmpi eq, %14, %17 : vector<16x128xi32>
    %19 = vector.extract_strided_slice %13 {offsets = [0, 2], sizes = [16, 1], strides = [1, 1]} : vector<16x128xf32> to vector<16x1xf32>
    %20 = vector.shape_cast %19 : vector<16x1xf32> to vector<16x1xf32>
    %21 = vector.broadcast %20 : vector<16x1xf32> to vector<16x128xf32>
    %22 = arith.select %18, %21, %16 : vector<16x128xi1>, vector<16x128xf32>
    %c1_i32 = arith.constant 1 : i32
    %23 = vector.broadcast %c1_i32 : i32 to vector<16x128xi32>
    %24 = arith.cmpi eq, %14, %23 : vector<16x128xi32>
    %25 = vector.extract_strided_slice %13 {offsets = [0, 1], sizes = [16, 1], strides = [1, 1]} : vector<16x128xf32> to vector<16x1xf32>
    %26 = vector.shape_cast %25 : vector<16x1xf32> to vector<16x1xf32>
    %27 = vector.broadcast %26 : vector<16x1xf32> to vector<16x128xf32>
    %28 = arith.select %24, %27, %22 : vector<16x128xi1>, vector<16x128xf32>
    %cst_11 = arith.constant 0.0544886887 : f32
    %29 = vector.broadcast %cst_11 : f32 to vector<16x128xf32>
    %30 = arith.mulf %29, %28 : vector<16x128xf32>
    %c1_i32_12 = arith.constant 1 : i32
    %31 = tpu.dynamic_rotate %13 by %c1_i32_12 dim 1 : vector<16x128xf32>, i32 -> vector<16x128xf32>
    %c0_i32_13 = arith.constant 0 : i32
    %32 = vector.broadcast %c0_i32_13 : i32 to vector<16x128xi32>
    %33 = arith.cmpi eq, %14, %32 : vector<16x128xi32>
    %34 = vector.extract_strided_slice %13 {offsets = [0, 1], sizes = [16, 1], strides = [1, 1]} : vector<16x128xf32> to vector<16x1xf32>
    %35 = vector.shape_cast %34 : vector<16x1xf32> to vector<16x1xf32>
    %36 = vector.broadcast %35 : vector<16x1xf32> to vector<16x128xf32>
    %37 = arith.select %33, %36, %31 : vector<16x128xi1>, vector<16x128xf32>
    %cst_14 = arith.constant 0.244201362 : f32
    %38 = vector.broadcast %cst_14 : f32 to vector<16x128xf32>
    %39 = arith.mulf %38, %37 : vector<16x128xf32>
    %40 = arith.addf %30, %39 : vector<16x128xf32>
    %cst_15 = arith.constant 0.402619958 : f32
    %41 = vector.broadcast %cst_15 : f32 to vector<16x128xf32>
    %42 = arith.mulf %41, %13 : vector<16x128xf32>
    %43 = arith.addf %40, %42 : vector<16x128xf32>
    %c127_i32 = arith.constant 127 : i32
    %44 = tpu.dynamic_rotate %13 by %c127_i32 dim 1 : vector<16x128xf32>, i32 -> vector<16x128xf32>
    %c127_i32_16 = arith.constant 127 : i32
    %45 = vector.broadcast %c127_i32_16 : i32 to vector<16x128xi32>
    %46 = arith.cmpi eq, %14, %45 : vector<16x128xi32>
    %47 = vector.extract_strided_slice %13 {offsets = [0, 126], sizes = [16, 1], strides = [1, 1]} : vector<16x128xf32> to vector<16x1xf32>
    %48 = vector.shape_cast %47 : vector<16x1xf32> to vector<16x1xf32>
    %49 = vector.broadcast %48 : vector<16x1xf32> to vector<16x128xf32>
    %50 = arith.select %46, %49, %44 : vector<16x128xi1>, vector<16x128xf32>
    %cst_17 = arith.constant 0.244201362 : f32
    %51 = vector.broadcast %cst_17 : f32 to vector<16x128xf32>
    %52 = arith.mulf %51, %50 : vector<16x128xf32>
    %53 = arith.addf %43, %52 : vector<16x128xf32>
    %c126_i32 = arith.constant 126 : i32
    %54 = tpu.dynamic_rotate %13 by %c126_i32 dim 1 : vector<16x128xf32>, i32 -> vector<16x128xf32>
    %c126_i32_18 = arith.constant 126 : i32
    %55 = vector.broadcast %c126_i32_18 : i32 to vector<16x128xi32>
    %56 = arith.cmpi eq, %14, %55 : vector<16x128xi32>
    %57 = vector.extract_strided_slice %13 {offsets = [0, 126], sizes = [16, 1], strides = [1, 1]} : vector<16x128xf32> to vector<16x1xf32>
    %58 = vector.shape_cast %57 : vector<16x1xf32> to vector<16x1xf32>
    %59 = vector.broadcast %58 : vector<16x1xf32> to vector<16x128xf32>
    %60 = arith.select %56, %59, %54 : vector<16x128xi1>, vector<16x128xf32>
    %c127_i32_19 = arith.constant 127 : i32
    %61 = vector.broadcast %c127_i32_19 : i32 to vector<16x128xi32>
    %62 = arith.cmpi eq, %14, %61 : vector<16x128xi32>
    %63 = vector.extract_strided_slice %13 {offsets = [0, 125], sizes = [16, 1], strides = [1, 1]} : vector<16x128xf32> to vector<16x1xf32>
    %64 = vector.shape_cast %63 : vector<16x1xf32> to vector<16x1xf32>
    %65 = vector.broadcast %64 : vector<16x1xf32> to vector<16x128xf32>
    %66 = arith.select %62, %65, %60 : vector<16x128xi1>, vector<16x128xf32>
    %cst_20 = arith.constant 0.0544886887 : f32
    %67 = vector.broadcast %cst_20 : f32 to vector<16x128xf32>
    %68 = arith.mulf %67, %66 : vector<16x128xf32>
    %69 = arith.addf %53, %68 : vector<16x128xf32>
    %c2_i32_21 = arith.constant 2 : i32
    %70 = tpu.dynamic_rotate %69 by %c2_i32_21 dim 0 : vector<16x128xf32>, i32 -> vector<16x128xf32>
    %c0_i32_22 = arith.constant 0 : i32
    %71 = vector.broadcast %c0_i32_22 : i32 to vector<16x128xi32>
    %72 = arith.cmpi eq, %15, %71 : vector<16x128xi32>
    %73 = vector.extract_strided_slice %69 {offsets = [2, 0], sizes = [1, 128], strides = [1, 1]} : vector<16x128xf32> to vector<1x128xf32>
    %74 = vector.shape_cast %73 : vector<1x128xf32> to vector<1x128xf32>
    %75 = vector.broadcast %74 : vector<1x128xf32> to vector<16x128xf32>
    %76 = arith.select %72, %75, %70 : vector<16x128xi1>, vector<16x128xf32>
    %c1_i32_23 = arith.constant 1 : i32
    %77 = vector.broadcast %c1_i32_23 : i32 to vector<16x128xi32>
    %78 = arith.cmpi eq, %15, %77 : vector<16x128xi32>
    %79 = vector.extract_strided_slice %69 {offsets = [1, 0], sizes = [1, 128], strides = [1, 1]} : vector<16x128xf32> to vector<1x128xf32>
    %80 = vector.shape_cast %79 : vector<1x128xf32> to vector<1x128xf32>
    %81 = vector.broadcast %80 : vector<1x128xf32> to vector<16x128xf32>
    %82 = arith.select %78, %81, %76 : vector<16x128xi1>, vector<16x128xf32>
    %cst_24 = arith.constant 0.0544886887 : f32
    %83 = vector.broadcast %cst_24 : f32 to vector<16x128xf32>
    %84 = arith.mulf %83, %82 : vector<16x128xf32>
    %c1_i32_25 = arith.constant 1 : i32
    %85 = tpu.dynamic_rotate %69 by %c1_i32_25 dim 0 : vector<16x128xf32>, i32 -> vector<16x128xf32>
    %c0_i32_26 = arith.constant 0 : i32
    %86 = vector.broadcast %c0_i32_26 : i32 to vector<16x128xi32>
    %87 = arith.cmpi eq, %15, %86 : vector<16x128xi32>
    %88 = vector.extract_strided_slice %69 {offsets = [1, 0], sizes = [1, 128], strides = [1, 1]} : vector<16x128xf32> to vector<1x128xf32>
    %89 = vector.shape_cast %88 : vector<1x128xf32> to vector<1x128xf32>
    %90 = vector.broadcast %89 : vector<1x128xf32> to vector<16x128xf32>
    %91 = arith.select %87, %90, %85 : vector<16x128xi1>, vector<16x128xf32>
    %cst_27 = arith.constant 0.244201362 : f32
    %92 = vector.broadcast %cst_27 : f32 to vector<16x128xf32>
    %93 = arith.mulf %92, %91 : vector<16x128xf32>
    %94 = arith.addf %84, %93 : vector<16x128xf32>
    %cst_28 = arith.constant 0.402619958 : f32
    %95 = vector.broadcast %cst_28 : f32 to vector<16x128xf32>
    %96 = arith.mulf %95, %69 : vector<16x128xf32>
    %97 = arith.addf %94, %96 : vector<16x128xf32>
    %c15_i32 = arith.constant 15 : i32
    %98 = tpu.dynamic_rotate %69 by %c15_i32 dim 0 : vector<16x128xf32>, i32 -> vector<16x128xf32>
    %c15_i32_29 = arith.constant 15 : i32
    %99 = vector.broadcast %c15_i32_29 : i32 to vector<16x128xi32>
    %100 = arith.cmpi eq, %15, %99 : vector<16x128xi32>
    %101 = vector.extract_strided_slice %69 {offsets = [14, 0], sizes = [1, 128], strides = [1, 1]} : vector<16x128xf32> to vector<1x128xf32>
    %102 = vector.shape_cast %101 : vector<1x128xf32> to vector<1x128xf32>
    %103 = vector.broadcast %102 : vector<1x128xf32> to vector<16x128xf32>
    %104 = arith.select %100, %103, %98 : vector<16x128xi1>, vector<16x128xf32>
    %cst_30 = arith.constant 0.244201362 : f32
    %105 = vector.broadcast %cst_30 : f32 to vector<16x128xf32>
    %106 = arith.mulf %105, %104 : vector<16x128xf32>
    %107 = arith.addf %97, %106 : vector<16x128xf32>
    %c14_i32 = arith.constant 14 : i32
    %108 = tpu.dynamic_rotate %69 by %c14_i32 dim 0 : vector<16x128xf32>, i32 -> vector<16x128xf32>
    %c14_i32_31 = arith.constant 14 : i32
    %109 = vector.broadcast %c14_i32_31 : i32 to vector<16x128xi32>
    %110 = arith.cmpi eq, %15, %109 : vector<16x128xi32>
    %111 = vector.extract_strided_slice %69 {offsets = [14, 0], sizes = [1, 128], strides = [1, 1]} : vector<16x128xf32> to vector<1x128xf32>
    %112 = vector.shape_cast %111 : vector<1x128xf32> to vector<1x128xf32>
    %113 = vector.broadcast %112 : vector<1x128xf32> to vector<16x128xf32>
    %114 = arith.select %110, %113, %108 : vector<16x128xi1>, vector<16x128xf32>
    %c15_i32_32 = arith.constant 15 : i32
    %115 = vector.broadcast %c15_i32_32 : i32 to vector<16x128xi32>
    %116 = arith.cmpi eq, %15, %115 : vector<16x128xi32>
    %117 = vector.extract_strided_slice %69 {offsets = [13, 0], sizes = [1, 128], strides = [1, 1]} : vector<16x128xf32> to vector<1x128xf32>
    %118 = vector.shape_cast %117 : vector<1x128xf32> to vector<1x128xf32>
    %119 = vector.broadcast %118 : vector<1x128xf32> to vector<16x128xf32>
    %120 = arith.select %116, %119, %114 : vector<16x128xi1>, vector<16x128xf32>
    %cst_33 = arith.constant 0.0544886887 : f32
    %121 = vector.broadcast %cst_33 : f32 to vector<16x128xf32>
    %122 = arith.mulf %121, %120 : vector<16x128xf32>
    %123 = arith.addf %107, %122 : vector<16x128xf32>
    %c1_i32_34 = arith.constant 1 : i32
    %124 = tpu.dynamic_rotate %123 by %c1_i32_34 dim 1 : vector<16x128xf32>, i32 -> vector<16x128xf32>
    %c1_i32_35 = arith.constant 1 : i32
    %125 = vector.broadcast %c1_i32_35 : i32 to vector<16x128xi32>
    %126 = arith.cmpi slt, %14, %125 : vector<16x128xi32>
    %127 = vector.extract_strided_slice %123 {offsets = [0, 0], sizes = [16, 1], strides = [1, 1]} : vector<16x128xf32> to vector<16x1xf32>
    %128 = vector.shape_cast %127 : vector<16x1xf32> to vector<16x1xf32>
    %129 = vector.broadcast %128 : vector<16x1xf32> to vector<16x128xf32>
    %130 = arith.select %126, %129, %124 : vector<16x128xi1>, vector<16x128xf32>
    %c127_i32_36 = arith.constant 127 : i32
    %131 = tpu.dynamic_rotate %123 by %c127_i32_36 dim 1 : vector<16x128xf32>, i32 -> vector<16x128xf32>
    %c127_i32_37 = arith.constant 127 : i32
    %132 = vector.broadcast %c127_i32_37 : i32 to vector<16x128xi32>
    %133 = arith.cmpi sge, %14, %132 : vector<16x128xi32>
    %134 = vector.extract_strided_slice %123 {offsets = [0, 127], sizes = [16, 1], strides = [1, 1]} : vector<16x128xf32> to vector<16x1xf32>
    %135 = vector.shape_cast %134 : vector<16x1xf32> to vector<16x1xf32>
    %136 = vector.broadcast %135 : vector<16x1xf32> to vector<16x128xf32>
    %137 = arith.select %133, %136, %131 : vector<16x128xi1>, vector<16x128xf32>
    %138 = arith.subf %137, %130 : vector<16x128xf32>
    %cst_38 = arith.constant 2.000000e+00 : f32
    %139 = vector.broadcast %cst_38 : f32 to vector<16x128xf32>
    %140 = arith.mulf %139, %123 : vector<16x128xf32>
    %141 = arith.addf %130, %140 : vector<16x128xf32>
    %142 = arith.addf %141, %137 : vector<16x128xf32>
    %c1_i32_39 = arith.constant 1 : i32
    %143 = tpu.dynamic_rotate %138 by %c1_i32_39 dim 0 : vector<16x128xf32>, i32 -> vector<16x128xf32>
    %c1_i32_40 = arith.constant 1 : i32
    %144 = vector.broadcast %c1_i32_40 : i32 to vector<16x128xi32>
    %145 = arith.cmpi slt, %15, %144 : vector<16x128xi32>
    %146 = vector.extract_strided_slice %138 {offsets = [0, 0], sizes = [1, 128], strides = [1, 1]} : vector<16x128xf32> to vector<1x128xf32>
    %147 = vector.shape_cast %146 : vector<1x128xf32> to vector<1x128xf32>
    %148 = vector.broadcast %147 : vector<1x128xf32> to vector<16x128xf32>
    %149 = arith.select %145, %148, %143 : vector<16x128xi1>, vector<16x128xf32>
    %cst_41 = arith.constant 2.000000e+00 : f32
    %150 = vector.broadcast %cst_41 : f32 to vector<16x128xf32>
    %151 = arith.mulf %150, %138 : vector<16x128xf32>
    %152 = arith.addf %149, %151 : vector<16x128xf32>
    %c15_i32_42 = arith.constant 15 : i32
    %153 = tpu.dynamic_rotate %138 by %c15_i32_42 dim 0 : vector<16x128xf32>, i32 -> vector<16x128xf32>
    %c15_i32_43 = arith.constant 15 : i32
    %154 = vector.broadcast %c15_i32_43 : i32 to vector<16x128xi32>
    %155 = arith.cmpi sge, %15, %154 : vector<16x128xi32>
    %156 = vector.extract_strided_slice %138 {offsets = [15, 0], sizes = [1, 128], strides = [1, 1]} : vector<16x128xf32> to vector<1x128xf32>
    %157 = vector.shape_cast %156 : vector<1x128xf32> to vector<1x128xf32>
    %158 = vector.broadcast %157 : vector<1x128xf32> to vector<16x128xf32>
    %159 = arith.select %155, %158, %153 : vector<16x128xi1>, vector<16x128xf32>
    %160 = arith.addf %152, %159 : vector<16x128xf32>
    %c15_i32_44 = arith.constant 15 : i32
    %161 = tpu.dynamic_rotate %142 by %c15_i32_44 dim 0 : vector<16x128xf32>, i32 -> vector<16x128xf32>
    %c15_i32_45 = arith.constant 15 : i32
    %162 = vector.broadcast %c15_i32_45 : i32 to vector<16x128xi32>
    %163 = arith.cmpi sge, %15, %162 : vector<16x128xi32>
    %164 = vector.extract_strided_slice %142 {offsets = [15, 0], sizes = [1, 128], strides = [1, 1]} : vector<16x128xf32> to vector<1x128xf32>
    %165 = vector.shape_cast %164 : vector<1x128xf32> to vector<1x128xf32>
    %166 = vector.broadcast %165 : vector<1x128xf32> to vector<16x128xf32>
    %167 = arith.select %163, %166, %161 : vector<16x128xi1>, vector<16x128xf32>
    %c1_i32_46 = arith.constant 1 : i32
    %168 = tpu.dynamic_rotate %142 by %c1_i32_46 dim 0 : vector<16x128xf32>, i32 -> vector<16x128xf32>
    %c1_i32_47 = arith.constant 1 : i32
    %169 = vector.broadcast %c1_i32_47 : i32 to vector<16x128xi32>
    %170 = arith.cmpi slt, %15, %169 : vector<16x128xi32>
    %171 = vector.extract_strided_slice %142 {offsets = [0, 0], sizes = [1, 128], strides = [1, 1]} : vector<16x128xf32> to vector<1x128xf32>
    %172 = vector.shape_cast %171 : vector<1x128xf32> to vector<1x128xf32>
    %173 = vector.broadcast %172 : vector<1x128xf32> to vector<16x128xf32>
    %174 = arith.select %170, %173, %168 : vector<16x128xi1>, vector<16x128xf32>
    %175 = arith.subf %167, %174 : vector<16x128xf32>
    %176 = arith.mulf %160, %160 : vector<16x128xf32>
    %177 = arith.mulf %175, %175 : vector<16x128xf32>
    %178 = arith.addf %176, %177 : vector<16x128xf32>
    %cst_48 = arith.constant 9.99999997E-7 : f32
    %179 = vector.broadcast %cst_48 : f32 to vector<16x128xf32>
    %180 = arith.addf %178, %179 : vector<16x128xf32>
    %181 = math.sqrt %180 : vector<16x128xf32>
    %c127_i32_49 = arith.constant 127 : i32
    %182 = tpu.dynamic_rotate %181 by %c127_i32_49 dim 1 : vector<16x128xf32>, i32 -> vector<16x128xf32>
    %c127_i32_50 = arith.constant 127 : i32
    %183 = vector.broadcast %c127_i32_50 : i32 to vector<16x128xi32>
    %184 = arith.cmpi sge, %14, %183 : vector<16x128xi32>
    %cst_51 = arith.constant 0.000000e+00 : f32
    %185 = vector.broadcast %cst_51 : f32 to vector<16x128xf32>
    %186 = arith.select %184, %185, %182 : vector<16x128xi1>, vector<16x128xf32>
    %c1_i32_52 = arith.constant 1 : i32
    %187 = tpu.dynamic_rotate %181 by %c1_i32_52 dim 1 : vector<16x128xf32>, i32 -> vector<16x128xf32>
    %c1_i32_53 = arith.constant 1 : i32
    %188 = vector.broadcast %c1_i32_53 : i32 to vector<16x128xi32>
    %189 = arith.cmpi slt, %14, %188 : vector<16x128xi32>
    %cst_54 = arith.constant 0.000000e+00 : f32
    %190 = vector.broadcast %cst_54 : f32 to vector<16x128xf32>
    %191 = arith.select %189, %190, %187 : vector<16x128xi1>, vector<16x128xf32>
    %c15_i32_55 = arith.constant 15 : i32
    %192 = tpu.dynamic_rotate %181 by %c15_i32_55 dim 0 : vector<16x128xf32>, i32 -> vector<16x128xf32>
    %c15_i32_56 = arith.constant 15 : i32
    %193 = vector.broadcast %c15_i32_56 : i32 to vector<16x128xi32>
    %194 = arith.cmpi sge, %15, %193 : vector<16x128xi32>
    %cst_57 = arith.constant 0.000000e+00 : f32
    %195 = vector.broadcast %cst_57 : f32 to vector<16x128xf32>
    %196 = arith.select %194, %195, %192 : vector<16x128xi1>, vector<16x128xf32>
    %c1_i32_58 = arith.constant 1 : i32
    %197 = tpu.dynamic_rotate %181 by %c1_i32_58 dim 0 : vector<16x128xf32>, i32 -> vector<16x128xf32>
    %c1_i32_59 = arith.constant 1 : i32
    %198 = vector.broadcast %c1_i32_59 : i32 to vector<16x128xi32>
    %199 = arith.cmpi slt, %15, %198 : vector<16x128xi32>
    %cst_60 = arith.constant 0.000000e+00 : f32
    %200 = vector.broadcast %cst_60 : f32 to vector<16x128xf32>
    %201 = arith.select %199, %200, %197 : vector<16x128xi1>, vector<16x128xf32>
    %c15_i32_61 = arith.constant 15 : i32
    %202 = tpu.dynamic_rotate %186 by %c15_i32_61 dim 0 : vector<16x128xf32>, i32 -> vector<16x128xf32>
    %c15_i32_62 = arith.constant 15 : i32
    %203 = vector.broadcast %c15_i32_62 : i32 to vector<16x128xi32>
    %204 = arith.cmpi sge, %15, %203 : vector<16x128xi32>
    %cst_63 = arith.constant 0.000000e+00 : f32
    %205 = vector.broadcast %cst_63 : f32 to vector<16x128xf32>
    %206 = arith.select %204, %205, %202 : vector<16x128xi1>, vector<16x128xf32>
    %c1_i32_64 = arith.constant 1 : i32
    %207 = tpu.dynamic_rotate %186 by %c1_i32_64 dim 0 : vector<16x128xf32>, i32 -> vector<16x128xf32>
    %c1_i32_65 = arith.constant 1 : i32
    %208 = vector.broadcast %c1_i32_65 : i32 to vector<16x128xi32>
    %209 = arith.cmpi slt, %15, %208 : vector<16x128xi32>
    %cst_66 = arith.constant 0.000000e+00 : f32
    %210 = vector.broadcast %cst_66 : f32 to vector<16x128xf32>
    %211 = arith.select %209, %210, %207 : vector<16x128xi1>, vector<16x128xf32>
    %c15_i32_67 = arith.constant 15 : i32
    %212 = tpu.dynamic_rotate %191 by %c15_i32_67 dim 0 : vector<16x128xf32>, i32 -> vector<16x128xf32>
    %c15_i32_68 = arith.constant 15 : i32
    %213 = vector.broadcast %c15_i32_68 : i32 to vector<16x128xi32>
    %214 = arith.cmpi sge, %15, %213 : vector<16x128xi32>
    %cst_69 = arith.constant 0.000000e+00 : f32
    %215 = vector.broadcast %cst_69 : f32 to vector<16x128xf32>
    %216 = arith.select %214, %215, %212 : vector<16x128xi1>, vector<16x128xf32>
    %c1_i32_70 = arith.constant 1 : i32
    %217 = tpu.dynamic_rotate %191 by %c1_i32_70 dim 0 : vector<16x128xf32>, i32 -> vector<16x128xf32>
    %c1_i32_71 = arith.constant 1 : i32
    %218 = vector.broadcast %c1_i32_71 : i32 to vector<16x128xi32>
    %219 = arith.cmpi slt, %15, %218 : vector<16x128xi32>
    %cst_72 = arith.constant 0.000000e+00 : f32
    %220 = vector.broadcast %cst_72 : f32 to vector<16x128xf32>
    %221 = arith.select %219, %220, %217 : vector<16x128xi1>, vector<16x128xf32>
    %222 = math.absf %160 : vector<16x128xf32>
    %223 = math.absf %175 : vector<16x128xf32>
    %cst_73 = arith.constant 0.414213568 : f32
    %224 = vector.broadcast %cst_73 : f32 to vector<16x128xf32>
    %225 = arith.mulf %224, %222 : vector<16x128xf32>
    %226 = arith.cmpf ole, %223, %225 : vector<16x128xf32>
    %cst_74 = arith.constant 2.41421366 : f32
    %227 = vector.broadcast %cst_74 : f32 to vector<16x128xf32>
    %228 = arith.mulf %227, %222 : vector<16x128xf32>
    %229 = arith.cmpf oge, %223, %228 : vector<16x128xf32>
    %230 = arith.mulf %160, %175 : vector<16x128xf32>
    %cst_75 = arith.constant 0.000000e+00 : f32
    %231 = vector.broadcast %cst_75 : f32 to vector<16x128xf32>
    %232 = arith.cmpf oge, %230, %231 : vector<16x128xf32>
    %233 = arith.select %232, %206, %216 : vector<16x128xi1>, vector<16x128xf32>
    %234 = arith.select %229, %196, %233 : vector<16x128xi1>, vector<16x128xf32>
    %235 = arith.select %226, %186, %234 : vector<16x128xi1>, vector<16x128xf32>
    %236 = arith.select %232, %221, %211 : vector<16x128xi1>, vector<16x128xf32>
    %237 = arith.select %229, %201, %236 : vector<16x128xi1>, vector<16x128xf32>
    %238 = arith.select %226, %191, %237 : vector<16x128xi1>, vector<16x128xf32>
    %239 = arith.cmpf ogt, %181, %235 : vector<16x128xf32>
    %240 = arith.cmpf ogt, %181, %238 : vector<16x128xf32>
    %241 = arith.andi %239, %240 : vector<16x128xi1>
    %cst_76 = arith.constant 0.000000e+00 : f32
    %242 = vector.broadcast %cst_76 : f32 to vector<16x128xf32>
    %243 = arith.select %241, %181, %242 : vector<16x128xi1>, vector<16x128xf32>
    %cst_77 = arith.constant 1.000000e-01 : f32
    %244 = vector.broadcast %cst_77 : f32 to vector<16x128xf32>
    %245 = arith.cmpf ogt, %243, %244 : vector<16x128xf32>
    %cst_78 = arith.constant 0.000000e+00 : f32
    %246 = vector.broadcast %cst_78 : f32 to vector<16x128xf32>
    %247 = arith.select %245, %243, %246 : vector<16x128xi1>, vector<16x128xf32>
    %c0_79 = arith.constant 0 : index
    %c0_80 = arith.constant 0 : index
    %c0_81 = arith.constant 0 : index
    %248 = vector.load %arg2[%c0_79, %c0_80, %c0_81] : memref<1x16x128xf32, #tpu.memory_space<vmem>>, vector<1x16x128xf32>
    %249 = vector.shape_cast %248 : vector<1x16x128xf32> to vector<16x128xf32>
    %250 = vector.shape_cast %243 : vector<16x128xf32> to vector<1x16x128xf32>
    tpu.vector_store %arg2[%c0_79, %c0_80, %c0_81], %250 {strides = array<i32>} : memref<1x16x128xf32, #tpu.memory_space<vmem>>, vector<1x16x128xf32>,
    %c0_82 = arith.constant 0 : index
    %c0_83 = arith.constant 0 : index
    %c0_84 = arith.constant 0 : index
    %251 = vector.load %arg3[%c0_82, %c0_83, %c0_84] : memref<1x16x128xf32, #tpu.memory_space<vmem>>, vector<1x16x128xf32>
    %252 = vector.shape_cast %251 : vector<1x16x128xf32> to vector<16x128xf32>
    %253 = vector.shape_cast %247 : vector<16x128xf32> to vector<1x16x128xf32>
    tpu.vector_store %arg3[%c0_82, %c0_83, %c0_84], %253 {strides = array<i32>} : memref<1x16x128xf32, #tpu.memory_space<vmem>>, vector<1x16x128xf32>,
    return
  }
  func.func @transform_0(%arg0: i32) -> (i32, i32, i32, i32) {
    %c0_i32 = arith.constant 0 : i32
    %c0_i32_0 = arith.constant 0 : i32
    %c0_i32_1 = arith.constant 0 : i32
    %c0_i32_2 = arith.constant 0 : i32
    return %arg0, %c0_i32, %c0_i32_0, %c0_i32_1 : i32, i32, i32, i32
  }
  func.func @transform_1(%arg0: i32) -> (i32, i32, i32) {
    %c0_i32 = arith.constant 0 : i32
    %c0_i32_0 = arith.constant 0 : i32
    %c0_i32_1 = arith.constant 0 : i32
    return %arg0, %c0_i32, %c0_i32_0 : i32, i32, i32
  }
  func.func @transform_2(%arg0: i32) -> (i32, i32, i32) {
    %c0_i32 = arith.constant 0 : i32
    %c0_i32_0 = arith.constant 0 : i32
    %c0_i32_1 = arith.constant 0 : i32
    return %arg0, %c0_i32, %c0_i32_0 : i32, i32, i32
  }
}

</mosaic_0001>

<llo_original>
// kernel: tpu_custom_call.1
$region0: #{tpu_custom_call.1}
  #allocation0 [shape = 'u32[]', space=smem, size = 0x4, offset = 0x4, fixed_abs, tag = 'smem constant byte address 0x4 - core index']
  #allocation1 [shape = 'u32[144,128]{1,0:T(1,128)}', space=vmem, size = 0x12000, scoped, tag = 'internal scratch']
  %s0 = inlined_call_operand.hbm [shape: f32[2,3,16,128], index: 0, kind: input, shape index: {}]
  %s1 = inlined_call_operand.hbm [shape: f32[2,16,128], index: 1, kind: output, shape index: {0}]
  %s2 = inlined_call_operand.hbm [shape: f32[2,16,128], index: 2, kind: output, shape index: {1}]
  %3 = xla_tuple %s1, %s2
  %s4 = sld [smem:[#allocation0]]
  $region49: #{tpu_custom_call.1} parent=0
    _
  %s6 = ssub.s32 1, %s4
  %s7 = scalar_select 0, %s6, %s4
  $region1: #{tpu_custom_call.1} parent=0
    #allocation2 [shape = 'u8[49152]{0}', space=vmem, size = 0xc000, scoped, tag = 'input window, operand 0']
    #allocation3 [shape = 's32[2]{0}', space=sflag, size = 0x8, scoped, tag = 'scoped memory for tpu_custom_call.1']
    #allocation4 [shape = 's32[2]{0}', space=sflag, size = 0x8, scoped, tag = 'scoped memory for tpu_custom_call.1']
    #allocation5 [shape = 'u8[16384]{0}', space=vmem, size = 0x4000, scoped, tag = 'output window, operand 0']
    #allocation6 [shape = 'u8[16384]{0}', space=vmem, size = 0x4000, scoped, tag = 'output window, operand 1']
    #allocation7 [shape = 's32[2]{0}', space=sflag, size = 0x8, scoped, tag = 'scoped memory for tpu_custom_call.1']
    %8 = vsyncpa [#allocation3], 0
    %s9 = scalar_lea.sflag [#allocation3], 1
    %10 = vsyncpa %s9, 0
    %11 = vsyncpa [#allocation4], 0
    %s12 = scalar_lea.sflag [#allocation4], 1
    %13 = vsyncpa %s12, 0
    %14 = vsyncpa [#allocation7], 0
    %s15 = scalar_lea.sflag [#allocation7], 1
    %16 = vsyncpa %s15, 0
    loop: start=0, step=1, limit=4
    $region2: #{tpu_custom_call.1} parent=1 // loop_pre_header
      _
    $region3: #{tpu_custom_call.1} parent=1 // loop_header
      %s18 = sphi 0, %s22
      %p19 = scmp.ge.s32.totalorder %s18, 4
      %s28 = sphi 0, %s30
      %s31 = sphi 0, %s28
      %s32 = sphi 0, %s31
      %s48 = sphi 0, %s32
      %s54 = sphi 0, %s56
      %s57 = sphi 0, %s54
      %s58 = sphi 0, %s57
      %s74 = sphi 0, %s58
      %s80 = sphi 0, %s82
      %s83 = sphi 0, %s80
      %s84 = sphi 0, %s83
      %s100 = sphi 0, %s84
    $region4: #{tpu_custom_call.1} parent=1 // loop_header_branch
      %21 = sbr.rel (%p19) target = $region8
    $region5: #{tpu_custom_call.1} parent=1 // loop_body
      %s23 = ssub.s32 %s18, 1
      %s24 = ssub.s32 %s18, 2
      %s25 = sadd.s32 %s18, 1
      %s26 = ssub.s32 %s18, %s25
      %p27 = scmp.eq.s32.totalorder %s26, 0
      %s29 = sadd.s32 %s28, 1
      %s30 = scalar_select %p27, %s28, %s29
      %p33 = pneg %p27
      %p34 = scmp.eq.s32.totalorder %s18, 1
      %p35 = por %p33, %p34
      %p36 = scmp.ne.s32.totalorder %s28, %s31
      %p37 = scmp.eq.s32.totalorder %s18, 0
      %p38 = por %p36, %p37
      %p39 = scmp.ne.s32.totalorder %s28, %s31
      %p40 = scmp.eq.s32.totalorder %s23, 1
      %p41 = por %p39, %p40
      %p42 = scmp.ne.s32.totalorder %s31, %s32
      %p43 = scmp.eq.s32.totalorder %s23, 0
      %p44 = por %p42, %p43
      %p45 = scmp.ne.s32.totalorder %s31, %s32
      %p46 = scmp.eq.s32.totalorder %s24, 1
      %p47 = por %p45, %p46
      %p49 = scmp.ne.s32.totalorder %s32, %s48
      %p50 = scmp.eq.s32.totalorder %s24, 0
      %p51 = por %p49, %p50
      %s52 = ssub.s32 %s18, %s25
      %p53 = scmp.eq.s32.totalorder %s52, 0
      %s55 = sadd.s32 %s54, 1
      %s56 = scalar_select %p53, %s54, %s55
      %p59 = pneg %p53
      %p60 = scmp.eq.s32.totalorder %s18, 1
      %p61 = por %p59, %p60
      %p62 = scmp.ne.s32.totalorder %s54, %s57
      %p63 = scmp.eq.s32.totalorder %s18, 0
      %p64 = por %p62, %p63
      %p65 = scmp.ne.s32.totalorder %s54, %s57
      %p66 = scmp.eq.s32.totalorder %s23, 1
      %p67 = por %p65, %p66
      %p68 = scmp.ne.s32.totalorder %s57, %s58
      %p69 = scmp.eq.s32.totalorder %s23, 0
      %p70 = por %p68, %p69
      %p71 = scmp.ne.s32.totalorder %s57, %s58
      %p72 = scmp.eq.s32.totalorder %s24, 1
      %p73 = por %p71, %p72
      %p75 = scmp.ne.s32.totalorder %s58, %s74
      %p76 = scmp.eq.s32.totalorder %s24, 0
      %p77 = por %p75, %p76
      %s78 = ssub.s32 %s18, %s25
      %p79 = scmp.eq.s32.totalorder %s78, 0
      %s81 = sadd.s32 %s80, 1
      %s82 = scalar_select %p79, %s80, %s81
      %p85 = pneg %p79
      %p86 = scmp.eq.s32.totalorder %s18, 1
      %p87 = por %p85, %p86
      %p88 = scmp.ne.s32.totalorder %s80, %s83
      %p89 = scmp.eq.s32.totalorder %s18, 0
      %p90 = por %p88, %p89
      %p91 = scmp.ne.s32.totalorder %s80, %s83
      %p92 = scmp.eq.s32.totalorder %s23, 1
      %p93 = por %p91, %p92
      %p94 = scmp.ne.s32.totalorder %s83, %s84
      %p95 = scmp.eq.s32.totalorder %s23, 0
      %p96 = por %p94, %p95
      %p97 = scmp.ne.s32.totalorder %s83, %s84
      %p98 = scmp.eq.s32.totalorder %s24, 1
      %p99 = por %p97, %p98
      %p101 = scmp.ne.s32.totalorder %s84, %s100
      %p102 = scmp.eq.s32.totalorder %s24, 0
      %p103 = por %p101, %p102
      %p104 = scmp.le.s32.totalorder 1, %s18
      %p105 = scmp.lt.s32.totalorder %s18, 3
      %p106 = pnand %p104, %p105
      %p107 = pneg %p106
      // Predicated region
      $region9: #{tpu_custom_call.1} parent=5 // pred_check
        _
      $region10: #{tpu_custom_call.1} parent=5 // pred_check_branch
        %109 = sbr.rel (%p106) target = $region12
      $region11: #{tpu_custom_call.1} parent=5 // pred_region
        %s110 = ssub.s32 %s18, 1
      $region12: #{tpu_custom_call.1} parent=5 // pred_fallthru
        _
      %p111 = scmp.lt.s32.totalorder %s18, 2
      // Predicated region
      $region13: #{tpu_custom_call.1} parent=5 // pred_check
        %p112 = pneg %p111
      $region14: #{tpu_custom_call.1} parent=5 // pred_check_branch
        %114 = sbr.rel (%p112) target = $region16
      $region15: #{tpu_custom_call.1} parent=5 // pred_region
        // Predicated region
        $region17: #{tpu_custom_call.1} parent=15 // pred_check
          %p115 = pneg %p38
        $region18: #{tpu_custom_call.1} parent=15 // pred_check_branch
          %117 = sbr.rel (%p115) target = $region20
        $region19: #{tpu_custom_call.1} parent=15 // pred_region
          %s118 = sand.u32 %s28, 1
          %s119 = scalar_lea.sflag [#allocation3], %s118
          %s120 = sand.u32 %s28, 1
          %s121 = smul.addr %s120, 48
          %s122 = scalar_lea.vmem [#allocation2], %s121
          %s124 = ssub.s32 768, 768
          %125 = vsyncadd %s119, %s124
          %s126 = smul.addr %s18, 6
          %s127 = smul.addr %s126, 128
          %s128 = scalar_lea.hbm %s0, %s127
          %s129 = sshll.u32 %s122, 4
          %s130 = int_to_ptr.vmem [resolvable:$true] %s129
          %135 = dma.hbm_to_vmem [thread:$0]  %s128, 768, %s130, %s119, 128, 128, 8
        $region20: #{tpu_custom_call.1} parent=15 // pred_fallthru
          _
      $region16: #{tpu_custom_call.1} parent=5 // pred_fallthru
        _
      %p136 = scmp.le.s32.totalorder 1, %s18
      %p137 = scmp.lt.s32.totalorder %s18, 3
      %p138 = pnand %p136, %p137
      %p139 = pneg %p138
      // Predicated region
      $region21: #{tpu_custom_call.1} parent=5 // pred_check
        _
      $region22: #{tpu_custom_call.1} parent=5 // pred_check_branch
        %141 = sbr.rel (%p138) target = $region24
      $region23: #{tpu_custom_call.1} parent=5 // pred_region
        %s142 = ssub.s32 %s18, 1
        %s143 = sand.u32 %s31, 1
        %s144 = scalar_lea.sflag [#allocation3], %s143
        %s145 = sand.u32 %s31, 1
        %s146 = smul.addr %s145, 48
        %s147 = scalar_lea.vmem [#allocation2], %s146
        // Predicated region
        $region25: #{tpu_custom_call.1} parent=23 // pred_check
          %p148 = pneg %p44
        $region26: #{tpu_custom_call.1} parent=23 // pred_check_branch
          %150 = sbr.rel (%p148) target = $region28
        $region27: #{tpu_custom_call.1} parent=23 // pred_region
          %151 = dma.done %s144, 768
        $region28: #{tpu_custom_call.1} parent=23 // pred_fallthru
          _
        %s152 = sand.u32 %s31, 1
        %s153 = scalar_lea.sflag [#allocation3], %s152
        %s154 = sand.u32 %s31, 1
        %s155 = smul.addr %s154, 48
        %s156 = scalar_lea.vmem [#allocation2], %s155
        %p157 = pneg %p44
        %p158 = pneg %p41
        %p159 = pneg %p70
        %p160 = pneg %p67
        %s161 = sand.u32 %s57, 1
        %s162 = scalar_lea.sflag [#allocation4], %s161
        %s163 = sand.u32 %s57, 1
        %s164 = smul.addr %s163, 16
        %s165 = scalar_lea.vmem [#allocation5], %s164
        %p166 = pneg %p96
        %p167 = pneg %p93
        %s168 = sand.u32 %s83, 1
        %s169 = scalar_lea.sflag [#allocation7], %s168
        %s170 = sand.u32 %s83, 1
        %s171 = smul.addr %s170, 16
        %s172 = scalar_lea.vmem [#allocation6], %s171
        %v173 = vld [vmem:[%s147] sm:$0xff]
        %v174 = vld [vmem:[%s147 + $0x8] sm:$0xff]
        %v175 = vmul.f32 %v173, 0.299
        %v176 = vmul.f32 %v174, 0.299
        %s177 = scalar_lea.vmem %s147, 16 [#allocation2]
        %v178 = vld [vmem:[%s177] sm:$0xff]
        %v179 = vld [vmem:[%s177 + $0x8] sm:$0xff]
        %v180 = vmul.f32 %v178, 0.587
        %v181 = vmul.f32 %v179, 0.587
        %v182 = vadd.f32 %v175, %v180
        %v183 = vadd.f32 %v176, %v181
        %s184 = scalar_lea.vmem %s147, 32 [#allocation2]
        %v185 = vld [vmem:[%s184] sm:$0xff]
        %v186 = vld [vmem:[%s184 + $0x8] sm:$0xff]
        %v187 = vmul.f32 %v185, 0.114
        %v188 = vmul.f32 %v186, 0.114
        %v189 = vadd.f32 %v182, %v187
        %v190 = vadd.f32 %v183, %v188
        %v191 = vlaneseq
        %v192 = vand.u32 %v191, 127
        %v193 = vlaneseq
        %v194 = vshrl.u32 %v193, 7
        %v195 = vadd.s32 %v194, 8
        %196 = vrot.lane.b32.xlu0 %v189, 2
        %v197 = vpop.permute.xlu0 %196
        %198 = vrot.lane.b32.xlu0 %v190, 2
        %v199 = vpop.permute.xlu0 %198
        %vm200 = vcmp.eq.s32.totalorder %v192, 0
        %202 = vset.pattern.permute.xlu0 2
        %203 = vperm.xlu0 %202, %v189
        %v204 = vpop.permute.xlu0 %203
        %207 = vset.pattern.permute.xlu0 2
        %208 = vperm.xlu0 %207, %v190
        %v209 = vpop.permute.xlu0 %208
        %v211 = vsel %vm200, %v204, %v197
        %v212 = vsel %vm200, %v209, %v199
        %vm213 = vcmp.eq.s32.totalorder %v192, 1
        %214 = vset.pattern.permute.xlu0 1
        %215 = vperm.xlu0 %214, %v189
        %v216 = vpop.permute.xlu0 %215
        %218 = vset.pattern.permute.xlu0 1
        %219 = vperm.xlu0 %218, %v190
        %v220 = vpop.permute.xlu0 %219
        %v222 = vsel %vm213, %v216, %v211
        %v223 = vsel %vm213, %v220, %v212
        %v224 = vmul.f32 %v222, 0.05448869
        %v225 = vmul.f32 %v223, 0.05448869
        %226 = vrot.lane.b32.xlu0 %v189, 1
        %v227 = vpop.permute.xlu0 %226
        %228 = vrot.lane.b32.xlu0 %v190, 1
        %v229 = vpop.permute.xlu0 %228
        %v230 = vsel %vm200, %v216, %v227
        %v231 = vsel %vm200, %v220, %v229
        %v232 = vmul.f32 %v230, 0.24420136
        %v233 = vmul.f32 %v231, 0.24420136
        %v234 = vadd.f32 %v224, %v232
        %v235 = vadd.f32 %v225, %v233
        %v236 = vmul.f32 %v189, 0.40261996
        %v237 = vmul.f32 %v190, 0.40261996
        %v238 = vadd.f32 %v234, %v236
        %v239 = vadd.f32 %v235, %v237
        %240 = vrot.lane.b32.xlu0 %v189, 127
        %v241 = vpop.permute.xlu0 %240
        %242 = vrot.lane.b32.xlu0 %v190, 127
        %v243 = vpop.permute.xlu0 %242
        %vm244 = vcmp.eq.s32.totalorder %v192, 127
        %245 = vset.pattern.permute.xlu0 126
        %246 = vperm.xlu0 %245, %v189
        %v247 = vpop.permute.xlu0 %246
        %249 = vset.pattern.permute.xlu0 126
        %250 = vperm.xlu0 %249, %v190
        %v251 = vpop.permute.xlu0 %250
        %v253 = vsel %vm244, %v247, %v241
        %v254 = vsel %vm244, %v251, %v243
        %v255 = vmul.f32 %v253, 0.24420136
        %v256 = vmul.f32 %v254, 0.24420136
        %v257 = vadd.f32 %v238, %v255
        %v258 = vadd.f32 %v239, %v256
        %259 = vrot.lane.b32.xlu0 %v189, 126
        %v260 = vpop.permute.xlu0 %259
        %261 = vrot.lane.b32.xlu0 %v190, 126
        %v262 = vpop.permute.xlu0 %261
        %vm263 = vcmp.eq.s32.totalorder %v192, 126
        %v264 = vsel %vm263, %v247, %v260
        %v265 = vsel %vm263, %v251, %v262
        %266 = vset.pattern.permute.xlu0 125
        %267 = vperm.xlu0 %266, %v189
        %v268 = vpop.permute.xlu0 %267
        %270 = vset.pattern.permute.xlu0 125
        %271 = vperm.xlu0 %270, %v190
        %v272 = vpop.permute.xlu0 %271
        %v274 = vsel %vm244, %v268, %v264
        %v275 = vsel %vm244, %v272, %v265
        %v276 = vmul.f32 %v274, 0.05448869
        %v277 = vmul.f32 %v275, 0.05448869
        %v278 = vadd.f32 %v257, %v276
        %v279 = vadd.f32 %v258, %v277
        %v280 = vrot.slane %v278, 6
        %v281 = vrot.slane %v279, 6
        %vm282 = vcmp.lt.s32.totalorder %v194, 2
        %v283 = vsel %vm282, %v280, %v281
        %v284 = vsel %vm282, %v281, %v280
        %vm285 = vcmp.eq.s32.totalorder %v194, 0
        %vm286 = vcmp.eq.s32.totalorder %v195, 0
        %v287 = vlaneseq
        %v288 = vshrl.u32 %v287, 7
        %v289 = vsub.s32 2, %v288
        %v290 = vrot.slane %v278, %v289
        %v291 = vsel %vm285, %v290, %v284
        %v292 = vsel %vm286, %v290, %v283
        %vm293 = vcmp.eq.s32.totalorder %v194, 1
        %vm294 = vcmp.eq.s32.totalorder %v195, 1
        %v295 = vlaneseq
        %v296 = vshrl.u32 %v295, 7
        %v297 = vsub.s32 1, %v296
        %v298 = vrot.slane %v278, %v297
        %v299 = vsel %vm293, %v298, %v291
        %v300 = vsel %vm294, %v298, %v292
        %v301 = vmul.f32 %v299, 0.05448869
        %v302 = vmul.f32 %v300, 0.05448869
        %v303 = vrot.slane %v278, 7
        %v304 = vrot.slane %v279, 7
        %vm305 = vcmp.lt.s32.totalorder %v194, 1
        %v306 = vsel %vm305, %v303, %v304
        %v307 = vsel %vm305, %v304, %v303
        %v308 = vsel %vm285, %v298, %v307
        %v309 = vsel %vm286, %v298, %v306
        %v310 = vmul.f32 %v308, 0.24420136
        %v311 = vmul.f32 %v309, 0.24420136
        %v312 = vadd.f32 %v301, %v310
        %v313 = vadd.f32 %v302, %v311
        %v314 = vmul.f32 %v278, 0.40261996
        %v315 = vmul.f32 %v279, 0.40261996
        %v316 = vadd.f32 %v312, %v314
        %v317 = vadd.f32 %v313, %v315
        %v318 = vrot.slane %v278, 1
        %v319 = vrot.slane %v279, 1
        %vm320 = vcmp.lt.s32.totalorder %v194, 7
        %v321 = vsel %vm320, %v318, %v319
        %v322 = vsel %vm320, %v319, %v318
        %vm323 = vcmp.eq.s32.totalorder %v194, 15
        %vm324 = vcmp.eq.s32.totalorder %v195, 15
        %v325 = vlaneseq
        %v326 = vshrl.u32 %v325, 7
        %v327 = vsub.s32 6, %v326
        %v328 = vrot.slane %v279, %v327
        %v329 = vsel %vm323, %v328, %v321
        %v330 = vsel %vm324, %v328, %v322
        %v331 = vmul.f32 %v329, 0.24420136
        %v332 = vmul.f32 %v330, 0.24420136
        %v333 = vadd.f32 %v316, %v331
        %v334 = vadd.f32 %v317, %v332
        %v335 = vrot.slane %v278, 2
        %v336 = vrot.slane %v279, 2
        %vm337 = vcmp.lt.s32.totalorder %v194, 6
        %v338 = vsel %vm337, %v335, %v336
        %v339 = vsel %vm337, %v336, %v335
        %vm340 = vcmp.eq.s32.totalorder %v194, 14
        %vm341 = vcmp.eq.s32.totalorder %v195, 14
        %v342 = vsel %vm340, %v328, %v338
        %v343 = vsel %vm341, %v328, %v339
        %v344 = vlaneseq
        %v345 = vshrl.u32 %v344, 7
        %v346 = vsub.s32 5, %v345
        %v347 = vrot.slane %v279, %v346
        %v348 = vsel %vm323, %v347, %v342
        %v349 = vsel %vm324, %v347, %v343
        %v350 = vmul.f32 %v348, 0.05448869
        %v351 = vmul.f32 %v349, 0.05448869
        %v352 = vadd.f32 %v333, %v350
        %v353 = vadd.f32 %v334, %v351
        %354 = vrot.lane.b32.xlu0 %v352, 1
        %v355 = vpop.permute.xlu0 %354
        %356 = vrot.lane.b32.xlu0 %v353, 1
        %v357 = vpop.permute.xlu0 %356
        %vm358 = vcmp.lt.s32.totalorder %v192, 1
        %360 = vset.pattern.permute.xlu0 0
        %361 = vperm.xlu0 %360, %v352
        %v362 = vpop.permute.xlu0 %361
        %365 = vset.pattern.permute.xlu0 0
        %366 = vperm.xlu0 %365, %v353
        %v367 = vpop.permute.xlu0 %366
        %v369 = vsel %vm358, %v362, %v355
        %v370 = vsel %vm358, %v367, %v357
        %371 = vrot.lane.b32.xlu0 %v352, 127
        %v372 = vpop.permute.xlu0 %371
        %373 = vrot.lane.b32.xlu0 %v353, 127
        %v374 = vpop.permute.xlu0 %373
        %vm375 = vcmp.ge.s32.totalorder %v192, 127
        %376 = vset.pattern.permute.xlu0 127
        %377 = vperm.xlu0 %376, %v352
        %v378 = vpop.permute.xlu0 %377
        %380 = vset.pattern.permute.xlu0 127
        %381 = vperm.xlu0 %380, %v353
        %v382 = vpop.permute.xlu0 %381
        %v384 = vsel %vm375, %v378, %v372
        %v385 = vsel %vm375, %v382, %v374
        %v386 = vsub.f32 %v384, %v369
        %v387 = vsub.f32 %v385, %v370
        %v388 = vmul.f32 %v352, 2.0
        %v389 = vmul.f32 %v353, 2.0
        %v390 = vadd.f32 %v369, %v388
        %v391 = vadd.f32 %v370, %v389
        %v392 = vadd.f32 %v390, %v384
        %v393 = vadd.f32 %v391, %v385
        %v394 = vrot.slane %v386, 7
        %v395 = vrot.slane %v387, 7
        %v396 = vsel %vm305, %v394, %v395
        %v397 = vsel %vm305, %v395, %v394
        %vm398 = vcmp.lt.s32.totalorder %v195, 1
        %v399 = vlaneseq
        %v400 = vshrl.u32 %v399, 7
        %v401 = vsub.s32 0, %v400
        %v402 = vrot.slane %v386, %v401
        %v403 = vsel %vm305, %v402, %v397
        %v404 = vsel %vm398, %v402, %v396
        %v405 = vmul.f32 %v386, 2.0
        %v406 = vmul.f32 %v387, 2.0
        %v407 = vadd.f32 %v403, %v405
        %v408 = vadd.f32 %v404, %v406
        %v409 = vrot.slane %v386, 1
        %v410 = vrot.slane %v387, 1
        %v411 = vsel %vm320, %v409, %v410
        %v412 = vsel %vm320, %v410, %v409
        %vm413 = vcmp.ge.s32.totalorder %v194, 15
        %vm414 = vcmp.ge.s32.totalorder %v195, 15
        %v415 = vlaneseq
        %v416 = vshrl.u32 %v415, 7
        %v417 = vsub.s32 7, %v416
        %v418 = vrot.slane %v387, %v417
        %v419 = vsel %vm413, %v418, %v411
        %v420 = vsel %vm414, %v418, %v412
        %v421 = vadd.f32 %v407, %v419
        %v422 = vadd.f32 %v408, %v420
        %v423 = vrot.slane %v392, 1
        %v424 = vrot.slane %v393, 1
        %v425 = vsel %vm320, %v423, %v424
        %v426 = vsel %vm320, %v424, %v423
        %v427 = vlaneseq
        %v428 = vshrl.u32 %v427, 7
        %v429 = vsub.s32 7, %v428
        %v430 = vrot.slane %v393, %v429
        %v431 = vsel %vm413, %v430, %v425
        %v432 = vsel %vm414, %v430, %v426
        %v433 = vrot.slane %v392, 7
        %v434 = vrot.slane %v393, 7
        %v435 = vsel %vm305, %v433, %v434
        %v436 = vsel %vm305, %v434, %v433
        %v437 = vlaneseq
        %v438 = vshrl.u32 %v437, 7
        %v439 = vsub.s32 0, %v438
        %v440 = vrot.slane %v392, %v439
        %v441 = vsel %vm305, %v440, %v436
        %v442 = vsel %vm398, %v440, %v435
        %v443 = vsub.f32 %v431, %v441
        %v444 = vsub.f32 %v432, %v442
        %v445 = vmul.f32 %v421, %v421
        %v446 = vmul.f32 %v422, %v422
        %v447 = vmul.f32 %v443, %v443
        %v448 = vmul.f32 %v444, %v444
        %v449 = vadd.f32 %v445, %v447
        %v450 = vadd.f32 %v446, %v448
        %v451 = vadd.f32 %v449, 1e-06
        %v452 = vadd.f32 %v450, 1e-06
        %v453 = vrsqrt.pop %v451
        %v454 = vmul.f32 %v451, %v453
        %vm455 = vcmp.eq.f32.partialorder %v451, inf
        %v456 = vsel %vm455, %v451, %v454
        %vm457 = vcmp.eq.f32.partialorder %v451, 0.0
        %v458 = vand.u32 %v451, 2147483648
        %v459 = vsel %vm457, %v458, %v456
        %v460 = vrsqrt.pop %v452
        %v461 = vmul.f32 %v452, %v460
        %vm462 = vcmp.eq.f32.partialorder %v452, inf
        %v463 = vsel %vm462, %v452, %v461
        %vm464 = vcmp.eq.f32.partialorder %v452, 0.0
        %v465 = vand.u32 %v452, 2147483648
        %v466 = vsel %vm464, %v465, %v463
        %467 = vrot.lane.b32.xlu0 %v459, 127
        %v468 = vpop.permute.xlu0 %467
        %469 = vrot.lane.b32.xlu0 %v466, 127
        %v470 = vpop.permute.xlu0 %469
        %v471 = vsel %vm375, 0.0, %v468
        %v472 = vsel %vm375, 0.0, %v470
        %473 = vrot.lane.b32.xlu0 %v459, 1
        %v474 = vpop.permute.xlu0 %473
        %475 = vrot.lane.b32.xlu0 %v466, 1
        %v476 = vpop.permute.xlu0 %475
        %v477 = vsel %vm358, 0.0, %v474
        %v478 = vsel %vm358, 0.0, %v476
        %v479 = vrot.slane %v459, 1
        %v480 = vrot.slane %v466, 1
        %v481 = vsel %vm320, %v479, %v480
        %v482 = vsel %vm320, %v480, %v479
        %v483 = vsel %vm413, 0.0, %v481
        %v484 = vsel %vm414, 0.0, %v482
        %v485 = vrot.slane %v459, 7
        %v486 = vrot.slane %v466, 7
        %v487 = vsel %vm305, %v485, %v486
        %v488 = vsel %vm305, %v486, %v485
        %v489 = vsel %vm305, 0.0, %v488
        %v490 = vsel %vm398, 0.0, %v487
        %v491 = vrot.slane %v471, 1
        %v492 = vrot.slane %v472, 1
        %v493 = vsel %vm320, %v491, %v492
        %v494 = vsel %vm320, %v492, %v491
        %v495 = vsel %vm413, 0.0, %v493
        %v496 = vsel %vm414, 0.0, %v494
        %v497 = vrot.slane %v471, 7
        %v498 = vrot.slane %v472, 7
        %v499 = vsel %vm305, %v497, %v498
        %v500 = vsel %vm305, %v498, %v497
        %v501 = vsel %vm305, 0.0, %v500
        %v502 = vsel %vm398, 0.0, %v499
        %v503 = vrot.slane %v477, 1
        %v504 = vrot.slane %v478, 1
        %v505 = vsel %vm320, %v503, %v504
        %v506 = vsel %vm320, %v504, %v503
        %v507 = vsel %vm413, 0.0, %v505
        %v508 = vsel %vm414, 0.0, %v506
        %v509 = vrot.slane %v477, 7
        %v510 = vrot.slane %v478, 7
        %v511 = vsel %vm305, %v509, %v510
        %v512 = vsel %vm305, %v510, %v509
        %v513 = vsel %vm305, 0.0, %v512
        %v514 = vsel %vm398, 0.0, %v511
        %v515 = vand.u32 2147483647, %v421
        %v516 = vand.u32 2147483647, %v422
        %v517 = vand.u32 2147483647, %v443
        %v518 = vand.u32 2147483647, %v444
        %v519 = vmul.f32 %v515, 0.41421357
        %v520 = vmul.f32 %v516, 0.41421357
        %vm521 = vcmp.le.f32.partialorder %v517, %v519
        %vm522 = vcmp.le.f32.partialorder %v518, %v520
        %v523 = vmul.f32 %v515, 2.4142137
        %v524 = vmul.f32 %v516, 2.4142137
        %vm525 = vcmp.ge.f32.partialorder %v517, %v523
        %vm526 = vcmp.ge.f32.partialorder %v518, %v524
        %v527 = vmul.f32 %v421, %v443
        %v528 = vmul.f32 %v422, %v444
        %vm529 = vcmp.ge.f32.partialorder %v527, 0.0
        %vm530 = vcmp.ge.f32.partialorder %v528, 0.0
        %v531 = vsel %vm529, %v495, %v507
        %v532 = vsel %vm530, %v496, %v508
        %v533 = vsel %vm525, %v483, %v531
        %v534 = vsel %vm526, %v484, %v532
        %v535 = vsel %vm521, %v471, %v533
        %v536 = vsel %vm522, %v472, %v534
        %v537 = vsel %vm529, %v513, %v501
        %v538 = vsel %vm530, %v514, %v502
        %v539 = vsel %vm525, %v489, %v537
        %v540 = vsel %vm526, %v490, %v538
        %v541 = vsel %vm521, %v477, %v539
        %v542 = vsel %vm522, %v478, %v540
        %vm543 = vcmp.gt.f32.partialorder %v459, %v535
        %vm544 = vcmp.gt.f32.partialorder %v466, %v536
        %vm545 = vcmp.gt.f32.partialorder %v459, %v541
        %vm546 = vcmp.gt.f32.partialorder %v466, %v542
        %vm547 = vmand %vm543, %vm545
        %vm548 = vmand %vm544, %vm546
        %v549 = vsel %vm547, %v459, 0.0
        %v550 = vsel %vm548, %v466, 0.0
        %vm551 = vcmp.gt.f32.partialorder %v549, 0.1
        %vm552 = vcmp.gt.f32.partialorder %v550, 0.1
        %v553 = vsel %vm551, %v549, 0.0
        %v554 = vsel %vm552, %v550, 0.0
        %555 = vst [vmem:[%s165] sm:$0xff] %v549
        %556 = vst [vmem:[%s165 + $0x8] sm:$0xff] %v550
        %557 = vst [vmem:[%s172] sm:$0xff] %v553
        %558 = vst [vmem:[%s172 + $0x8] sm:$0xff] %v554
        %s559 = sand.u32 %s57, 1
        %s560 = scalar_lea.sflag [#allocation4], %s559
        %s561 = sand.u32 %s57, 1
        %s562 = smul.addr %s561, 16
        %s563 = scalar_lea.vmem [#allocation5], %s562
        %s564 = sand.u32 %s83, 1
        %s565 = scalar_lea.sflag [#allocation7], %s564
        %s566 = sand.u32 %s83, 1
        %s567 = smul.addr %s566, 16
        %s568 = scalar_lea.vmem [#allocation6], %s567
        // Predicated region
        $region29: #{tpu_custom_call.1} parent=23 // pred_check
          %p569 = pneg %p67
        $region30: #{tpu_custom_call.1} parent=23 // pred_check_branch
          %571 = sbr.rel (%p569) target = $region32
        $region31: #{tpu_custom_call.1} parent=23 // pred_region
          %s573 = ssub.s32 256, 256
          %574 = vsyncadd %s560, %s573
          %s575 = smul.addr %s23, 2
          %s576 = smul.addr %s575, 128
          %s577 = scalar_lea.hbm %s1, %s576
          %s578 = sshll.u32 %s563, 4
          %s579 = int_to_ptr.vmem [resolvable:$true] %s578
          %584 = dma.vmem_to_hbm [thread:$0]  %s579, 256, %s577, %s560, 128, 128, 8
        $region32: #{tpu_custom_call.1} parent=23 // pred_fallthru
          _
        // Predicated region
        $region33: #{tpu_custom_call.1} parent=23 // pred_check
          %p585 = pneg %p93
        $region34: #{tpu_custom_call.1} parent=23 // pred_check_branch
          %587 = sbr.rel (%p585) target = $region36
        $region35: #{tpu_custom_call.1} parent=23 // pred_region
          %s589 = ssub.s32 256, 256
          %590 = vsyncadd %s565, %s589
          %s591 = smul.addr %s23, 2
          %s592 = smul.addr %s591, 128
          %s593 = scalar_lea.hbm %s2, %s592
          %s594 = sshll.u32 %s568, 4
          %s595 = int_to_ptr.vmem [resolvable:$true] %s594
          %600 = dma.vmem_to_hbm [thread:$0]  %s595, 256, %s593, %s565, 128, 128, 8
        $region36: #{tpu_custom_call.1} parent=23 // pred_fallthru
          _
      $region24: #{tpu_custom_call.1} parent=5 // pred_fallthru
        _
      %p601 = scmp.le.s32.totalorder 2, %s18
      // Predicated region
      $region37: #{tpu_custom_call.1} parent=5 // pred_check
        %p602 = pneg %p601
      $region38: #{tpu_custom_call.1} parent=5 // pred_check_branch
        %604 = sbr.rel (%p602) target = $region40
      $region39: #{tpu_custom_call.1} parent=5 // pred_region
        %s605 = ssub.s32 %s18, 2
        // Predicated region
        $region41: #{tpu_custom_call.1} parent=39 // pred_check
          %p606 = pneg %p73
        $region42: #{tpu_custom_call.1} parent=39 // pred_check_branch
          %608 = sbr.rel (%p606) target = $region44
        $region43: #{tpu_custom_call.1} parent=39 // pred_region
          %s609 = sand.u32 %s58, 1
          %s610 = scalar_lea.sflag [#allocation4], %s609
          %s611 = sand.u32 %s58, 1
          %s612 = smul.addr %s611, 16
          %s613 = scalar_lea.vmem [#allocation5], %s612
          %614 = dma.done %s610, 256
        $region44: #{tpu_custom_call.1} parent=39 // pred_fallthru
          _
        // Predicated region
        $region45: #{tpu_custom_call.1} parent=39 // pred_check
          %p615 = pneg %p99
        $region46: #{tpu_custom_call.1} parent=39 // pred_check_branch
          %617 = sbr.rel (%p615) target = $region48
        $region47: #{tpu_custom_call.1} parent=39 // pred_region
          %s618 = sand.u32 %s84, 1
          %s619 = scalar_lea.sflag [#allocation7], %s618
          %s620 = sand.u32 %s84, 1
          %s621 = smul.addr %s620, 16
          %s622 = scalar_lea.vmem [#allocation6], %s621
          %623 = dma.done %s619, 256
        $region48: #{tpu_custom_call.1} parent=39 // pred_fallthru
          _
      $region40: #{tpu_custom_call.1} parent=5 // pred_fallthru
        _
    $region6: #{tpu_custom_call.1} parent=1 // loop_footer
      %s22 = sadd.s32 1, %s18
    $region7: #{tpu_custom_call.1} parent=1 // loop_footer_branch
      %17 = sbr.rel target = $region3
    $region8: #{tpu_custom_call.1} parent=1 // loop_exit
      _
    %624 = vsyncpa [#allocation3], 1
    %s625 = scalar_lea.sflag [#allocation3], 1
    %626 = vsyncpa %s625, 1
    %627 = vsyncpa [#allocation4], 1
    %s628 = scalar_lea.sflag [#allocation4], 1
    %629 = vsyncpa %s628, 1
    %630 = vsyncpa [#allocation7], 1
    %s631 = scalar_lea.sflag [#allocation7], 1
    %632 = vsyncpa %s631, 1

</llo_original>
